<compile_context>
chip_gen: v6e
topology: v6e:2x2x1
jax: 0.10.0
libtpu: 0.0.40
codegen_flags: <defaults>
</compile_context>

<pallas_src>
import jax
import jax.numpy as jnp
from jax.experimental import pallas as pl
from jax.experimental.pallas import tpu as pltpu


def channel_attention_kernel(x_ref, w1_ref, w2_ref, o_ref):
    # x_ref : (TB, C, L)   current slab of batch elements
    # w1_ref: (H, C)       first Linear weight (PyTorch layout: out x in)
    # w2_ref: (C, H)       second Linear weight
    # o_ref : (TB, C, L)
    x = x_ref[...]                                            # input dtype

    # Pooling with f32 accumulation; do NOT materialize an f32 copy of the tile.
    avg = jnp.mean(x, axis=-1, dtype=jnp.float32)             # (TB, C)
    mx = jnp.max(x, axis=-1).astype(jnp.float32)              # (TB, C) (max is exact)
    pooled = jnp.concatenate([avg, mx], axis=0)               # (2*TB, C)

    w1 = w1_ref[...].astype(jnp.float32)                      # (H, C)
    w2 = w2_ref[...].astype(jnp.float32)                      # (C, H)

    # Single fused FC evaluation for both pooled stats of all TB elements
    # (2 MXU pushes instead of 4; contraction on last dims, no transposes).
    h = jnp.einsum("nc,hc->nh", pooled, w1,
                   preferred_element_type=jnp.float32)        # (2*TB, H)
    h = jnp.maximum(h, 0.0)                                   # ReLU
    fc = jnp.einsum("nh,ch->nc", h, w2,
                    preferred_element_type=jnp.float32)       # (2*TB, C)

    tb = x.shape[0]
    scale = jax.nn.sigmoid(fc[:tb] + fc[tb:])                 # (TB, C), f32

    # Final multiply in the input dtype (native bf16 VALU on v6e/v7x).
    o_ref[...] = x * scale.astype(o_ref.dtype)[:, :, None]    # broadcast over L


def _pick_tb(B, C, L, itemsize, weight_bytes, vmem_budget):
    """Largest divisor TB of B whose double-buffered in+out slabs fit VMEM.

    Keeps at least 2 grid steps when B >= 2 so the batch axis can shard
    across the two TensorCores on v7x (megacore)."""
    tb_cap = max(1, B // 2) if B >= 2 else 1
    best = 1
    for tb in range(1, tb_cap + 1):
        if B % tb:
            continue
        need = 4 * tb * C * L * itemsize + 2 * weight_bytes   # 2x buffers in + out
        if need <= vmem_budget:
            best = tb
    return best


def channel_attention(x, w1, w2):
    """x: (B, C, L); w1: (H, C); w2: (C, H). Returns (B, C, L)."""
    B, C, L = x.shape
    H = w1.shape[0]
    assert w1.shape == (H, C) and w2.shape == (C, H)

    # Explicit VMEM budget (default scoped limit is only 16/32 MiB and v7x has
    # 64 MiB physical per TC); leave headroom for the compiler.
    try:
        vmem_cap = pltpu.get_tpu_info().vmem_capacity_bytes
    except Exception:  # pragma: no cover - conservative fallback
        vmem_cap = 64 * 1024 * 1024
    vmem_budget = int(vmem_cap * 0.75)

    weight_bytes = w1.size * w1.dtype.itemsize + w2.size * w2.dtype.itemsize
    tb = _pick_tb(B, C, L, x.dtype.itemsize, weight_bytes, vmem_budget)
    grid = (B // tb,)

    # TODO(synk): for very large L where a full (TB, C, L) slab cannot fit the
    # VMEM budget, split into a tiny pool+FC pass plus a lane-tiled apply pass.
    return pl.pallas_call(
        channel_attention_kernel,
        out_shape=jax.ShapeDtypeStruct((B, C, L), x.dtype),
        grid_spec=pltpu.PrefetchScalarGridSpec(
            num_scalar_prefetch=0,
            grid=grid,
            in_specs=[
                pl.BlockSpec((tb, C, L), lambda b: (b, 0, 0)),
                pl.BlockSpec((H, C), lambda b: (0, 0)),   # weights stay resident
                pl.BlockSpec((C, H), lambda b: (0, 0)),
            ],
            out_specs=pl.BlockSpec((tb, C, L), lambda b: (b, 0, 0)),
        ),
        compiler_params=pltpu.CompilerParams(
            dimension_semantics=("parallel",),
            vmem_limit_bytes=vmem_budget,
        ),
    )(x, w1, w2)


def channel_attention_ref(x, w1, w2):
    """Pure-JAX reference mirroring the PyTorch forward."""
    xf = x.astype(jnp.float32)
    avg = jnp.mean(xf, axis=-1)                    # (B, C)
    mx = jnp.max(xf, axis=-1)                      # (B, C)

    def fc(v):                                     # v: (B, C)
        h = jnp.maximum(v @ w1.astype(jnp.float32).T, 0.0)     # (B, H)
        return h @ w2.astype(jnp.float32).T                    # (B, C)

    scale = jax.nn.sigmoid(fc(avg) + fc(mx))[..., None]        # (B, C, 1)
    return (scale * xf).astype(x.dtype)


if __name__ == "__main__":
    # Small but lane-dense shapes: L is a multiple of 128 so stores are
    # unmasked; B=4 gives a 2-step grid with TB=2 batch elements per step.
    B, C, L = 4, 32, 128
    reduction_ratio = 16
    H = C // reduction_ratio                       # = 2

    key = jax.random.PRNGKey(0)
    kx, k1, k2 = jax.random.split(key, 3)
    x = jax.random.normal(kx, (B, C, L), dtype=jnp.float32)
    # nn.Linear(C, H, bias=False) -> weight (H, C); nn.Linear(H, C) -> (C, H)
    w1 = jax.random.normal(k1, (H, C), dtype=jnp.float32) * (1.0 / jnp.sqrt(C))
    w2 = jax.random.normal(k2, (C, H), dtype=jnp.float32) * (1.0 / jnp.sqrt(H))

    out = channel_attention(x, w1, w2)
    out = jax.block_until_ready(out)

    ref = channel_attention_ref(x, w1, w2)
    assert out.shape == (B, C, L)
    assert jnp.allclose(out, ref, atol=1e-5, rtol=1e-5), "mismatch vs reference"

    print("KERNEL_OK")
</pallas_src>

<mosaic_0001>
module attributes {stable_mosaic.version = 11 : i64} {
  func.func @channel_attention_kernel(%arg0: i32, %arg1: memref<2x32x128xf32, #tpu.memory_space<vmem>>, %arg2: memref<2x32xf32, #tpu.memory_space<vmem>>, %arg3: memref<32x2xf32, #tpu.memory_space<vmem>>, %arg4: memref<2x32x128xf32, #tpu.memory_space<vmem>>) attributes {dimension_semantics = [#tpu.dimension_semantics<parallel>], iteration_bounds = array<i64: 2>, scalar_prefetch = 0 : i64, scratch_operands = 0 : i64, tpu.core_type = #tpu.core_type<tc>, window_params = [{transform_indices = @transform_0, window_bounds = array<i64: 2, 32, 128>}, {pipeline_mode = #tpu.pipeline_mode<synchronous>, transform_indices = @transform_1, window_bounds = array<i64: 2, 32>}, {pipeline_mode = #tpu.pipeline_mode<synchronous>, transform_indices = @transform_2, window_bounds = array<i64: 32, 2>}, {transform_indices = @transform_3, window_bounds = array<i64: 2, 32, 128>}]} {
    %c0 = arith.constant 0 : index
    %c0_0 = arith.constant 0 : index
    %c0_1 = arith.constant 0 : index
    %0 = vector.load %arg1[%c0, %c0_0, %c0_1] : memref<2x32x128xf32, #tpu.memory_space<vmem>>, vector<2x32x128xf32>
    %cst = arith.constant dense<0.000000e+00> : vector<2x32xf32>
    %1 = vector.multi_reduction <add>, %0, %cst [2] : vector<2x32x128xf32> to vector<2x32xf32>
    %cst_2 = arith.constant 1.280000e+02 : f32
    %2 = vector.broadcast %cst_2 : f32 to vector<2x32xf32>
    %3 = arith.divf %1, %2 : vector<2x32xf32>
    %cst_3 = arith.constant dense<0xFF800000> : vector<2x32xf32>
    %4 = vector.multi_reduction <maximumf>, %0, %cst_3 [2] : vector<2x32x128xf32> to vector<2x32xf32>
    %5 = tpu.concatenate %3, %4 in 0 : vector<2x32xf32>, vector<2x32xf32> -> vector<4x32xf32>
    %c0_4 = arith.constant 0 : index
    %c0_5 = arith.constant 0 : index
    %6 = vector.load %arg2[%c0_4, %c0_5] : memref<2x32xf32, #tpu.memory_space<vmem>>, vector<2x32xf32>
    %c0_6 = arith.constant 0 : index
    %c0_7 = arith.constant 0 : index
    %7 = vector.load %arg3[%c0_6, %c0_7] : memref<32x2xf32, #tpu.memory_space<vmem>>, vector<32x2xf32>
    "tpu.trace_start"() <{level = 10 : i32, message = "nc,hc->nh"}> : () -> ()
    %cst_8 = arith.constant dense<0.000000e+00> : vector<4x2xf32>
    %8 = tpu.matmul %5, %6, %cst_8 {dimension_numbers = #tpu.dot_dimension_numbers<[1], [1], [0], [0], [0, 0, 1, 0], [], []>} : vector<4x32xf32>, vector<2x32xf32>, vector<4x2xf32> -> vector<4x2xf32>
    "tpu.trace_stop"() : () -> ()
    %cst_9 = arith.constant 0.000000e+00 : f32
    %9 = vector.broadcast %cst_9 : f32 to vector<4x2xf32>
    %10 = arith.maximumf %8, %9 : vector<4x2xf32>
    "tpu.trace_start"() <{level = 10 : i32, message = "nh,ch->nc"}> : () -> ()
    %cst_10 = arith.constant dense<0.000000e+00> : vector<4x32xf32>
    %11 = tpu.matmul %10, %7, %cst_10 {dimension_numbers = #tpu.dot_dimension_numbers<[1], [1], [0], [0], [0, 0, 1, 0], [], []>} : vector<4x2xf32>, vector<32x2xf32>, vector<4x32xf32> -> vector<4x32xf32>
    "tpu.trace_stop"() : () -> ()
    %12 = vector.extract_strided_slice %11 {offsets = [0, 0], sizes = [2, 32], strides = [1, 1]} : vector<4x32xf32> to vector<2x32xf32>
    %13 = vector.extract_strided_slice %11 {offsets = [2, 0], sizes = [2, 32], strides = [1, 1]} : vector<4x32xf32> to vector<2x32xf32>
    %14 = arith.addf %12, %13 : vector<2x32xf32>
    %15 = arith.negf %14 : vector<2x32xf32>
    %16 = math.exp %15 : vector<2x32xf32>
    %cst_11 = arith.constant 1.000000e+00 : f32
    %17 = vector.broadcast %cst_11 : f32 to vector<2x32xf32>
    %18 = arith.addf %17, %16 : vector<2x32xf32>
    %19 = arith.divf %17, %18 : vector<2x32xf32>
    %20 = vector.shape_cast %19 : vector<2x32xf32> to vector<2x32x1xf32>
    %21 = vector.broadcast %20 : vector<2x32x1xf32> to vector<2x32x128xf32>
    %22 = arith.mulf %0, %21 : vector<2x32x128xf32>
    %c0_12 = arith.constant 0 : index
    %c0_13 = arith.constant 0 : index
    %c0_14 = arith.constant 0 : index
    %23 = vector.load %arg4[%c0_12, %c0_13, %c0_14] : memref<2x32x128xf32, #tpu.memory_space<vmem>>, vector<2x32x128xf32>
    tpu.vector_store %arg4[%c0_12, %c0_13, %c0_14], %22 {strides = array<i32>} : memref<2x32x128xf32, #tpu.memory_space<vmem>>, vector<2x32x128xf32>,
    return
  }
  func.func @transform_0(%arg0: i32) -> (i32, i32, i32) {
    %c0_i32 = arith.constant 0 : i32
    %c0_i32_0 = arith.constant 0 : i32
    %c0_i32_1 = arith.constant 0 : i32
    return %arg0, %c0_i32, %c0_i32_0 : i32, i32, i32
  }
  func.func @transform_1(%arg0: i32) -> (i32, i32) {
    %c0_i32 = arith.constant 0 : i32
    %c0_i32_0 = arith.constant 0 : i32
    %c0_i32_1 = arith.constant 0 : i32
    return %c0_i32, %c0_i32_0 : i32, i32
  }
  func.func @transform_2(%arg0: i32) -> (i32, i32) {
    %c0_i32 = arith.constant 0 : i32
    %c0_i32_0 = arith.constant 0 : i32
    %c0_i32_1 = arith.constant 0 : i32
    return %c0_i32, %c0_i32_0 : i32, i32
  }
  func.func @transform_3(%arg0: i32) -> (i32, i32, i32) {
    %c0_i32 = arith.constant 0 : i32
    %c0_i32_0 = arith.constant 0 : i32
    %c0_i32_1 = arith.constant 0 : i32
    return %arg0, %c0_i32, %c0_i32_0 : i32, i32, i32
  }
}

</mosaic_0001>

<llo_original>
// kernel: tpu_custom_call.1
$region0: #{tpu_custom_call.1}
  #allocation0 [shape = 'u32[]', space=smem, size = 0x4, offset = 0x4, fixed_abs, tag = 'smem constant byte address 0x4 - core index']
  #allocation1 [shape = 'u32[144,128]{1,0:T(1,128)}', space=vmem, size = 0x12000, scoped, tag = 'internal scratch']
  %s0 = inlined_call_operand.hbm [shape: f32[4,32,128], index: 0, kind: input, shape index: {}]
  %s1 = inlined_call_operand.vmem [shape: f32[2,32], index: 1, kind: input, shape index: {}]
  %s2 = inlined_call_operand.vmem [shape: f32[32,2], index: 2, kind: input, shape index: {}]
  %s3 = inlined_call_operand.hbm [shape: f32[4,32,128], index: 3, kind: output, shape index: {}]
  %s4 = sld [smem:[#allocation0]]
  $region49: #{tpu_custom_call.1} parent=0
    _
  %s6 = ssub.s32 1, %s4
  %s7 = scalar_select 0, %s6, %s4
  $region1: #{tpu_custom_call.1} parent=0
    #allocation2 [shape = 'u8[65536]{0}', space=vmem, size = 0x10000, scoped, tag = 'input window, operand 0']
    #allocation3 [shape = 's32[2]{0}', space=sflag, size = 0x8, scoped, tag = 'scoped memory for tpu_custom_call.1']
    #allocation4 [shape = 's32[2]{0}', space=sflag, size = 0x8, scoped, tag = 'scoped memory for tpu_custom_call.1']
    #allocation5 [shape = 'u8[65536]{0}', space=vmem, size = 0x10000, scoped, tag = 'output window, operand 0']
    %8 = vsyncpa [#allocation3], 0
    %s9 = scalar_lea.sflag [#allocation3], 1
    %10 = vsyncpa %s9, 0
    %11 = vsyncpa [#allocation4], 0
    %s12 = scalar_lea.sflag [#allocation4], 1
    %13 = vsyncpa %s12, 0
    loop: start=0, step=1, limit=4
    $region2: #{tpu_custom_call.1} parent=1 // loop_pre_header
      _
    $region3: #{tpu_custom_call.1} parent=1 // loop_header
      %s15 = sphi 0, %s19
      %p16 = scmp.ge.s32.totalorder %s15, 4
      %s25 = sphi 0, %s27
      %s28 = sphi 0, %s25
      %s29 = sphi 0, %s28
      %s45 = sphi 0, %s29
      %s49 = sphi 0, %s49
      %s51 = sphi 0, %s49
      %s52 = sphi 0, %s51
      %s66 = sphi 0, %s52
      %s70 = sphi 0, %s70
      %s72 = sphi 0, %s70
      %s73 = sphi 0, %s72
      %s87 = sphi 0, %s73
      %s93 = sphi 0, %s95
      %s96 = sphi 0, %s93
      %s97 = sphi 0, %s96
      %s113 = sphi 0, %s97
    $region4: #{tpu_custom_call.1} parent=1 // loop_header_branch
      %18 = sbr.rel (%p16) target = $region8
    $region5: #{tpu_custom_call.1} parent=1 // loop_body
      %s20 = ssub.s32 %s15, 1
      %s21 = ssub.s32 %s15, 2
      %s22 = sadd.s32 %s15, 1
      %s23 = ssub.s32 %s15, %s22
      %p24 = scmp.eq.s32.totalorder %s23, 0
      %s26 = sadd.s32 %s25, 1
      %s27 = scalar_select %p24, %s25, %s26
      %p30 = pneg %p24
      %p31 = scmp.eq.s32.totalorder %s15, 1
      %p32 = por %p30, %p31
      %p33 = scmp.ne.s32.totalorder %s25, %s28
      %p34 = scmp.eq.s32.totalorder %s15, 0
      %p35 = por %p33, %p34
      %p36 = scmp.ne.s32.totalorder %s25, %s28
      %p37 = scmp.eq.s32.totalorder %s20, 1
      %p38 = por %p36, %p37
      %p39 = scmp.ne.s32.totalorder %s28, %s29
      %p40 = scmp.eq.s32.totalorder %s20, 0
      %p41 = por %p39, %p40
      %p42 = scmp.ne.s32.totalorder %s28, %s29
      %p43 = scmp.eq.s32.totalorder %s21, 1
      %p44 = por %p42, %p43
      %p46 = scmp.ne.s32.totalorder %s29, %s45
      %p47 = scmp.eq.s32.totalorder %s21, 0
      %p48 = por %p46, %p47
      %s50 = sadd.s32 %s49, 1
      %p53 = scmp.eq.s32.totalorder %s15, 1
      %p54 = scmp.ne.s32.totalorder %s49, %s51
      %p55 = scmp.eq.s32.totalorder %s15, 0
      %p56 = por %p54, %p55
      %p57 = scmp.ne.s32.totalorder %s49, %s51
      %p58 = scmp.eq.s32.totalorder %s20, 1
      %p59 = por %p57, %p58
      %p60 = scmp.ne.s32.totalorder %s51, %s52
      %p61 = scmp.eq.s32.totalorder %s20, 0
      %p62 = por %p60, %p61
      %p63 = scmp.ne.s32.totalorder %s51, %s52
      %p64 = scmp.eq.s32.totalorder %s21, 1
      %p65 = por %p63, %p64
      %p67 = scmp.ne.s32.totalorder %s52, %s66
      %p68 = scmp.eq.s32.totalorder %s21, 0
      %p69 = por %p67, %p68
      %s71 = sadd.s32 %s70, 1
      %p74 = scmp.eq.s32.totalorder %s15, 1
      %p75 = scmp.ne.s32.totalorder %s70, %s72
      %p76 = scmp.eq.s32.totalorder %s15, 0
      %p77 = por %p75, %p76
      %p78 = scmp.ne.s32.totalorder %s70, %s72
      %p79 = scmp.eq.s32.totalorder %s20, 1
      %p80 = por %p78, %p79
      %p81 = scmp.ne.s32.totalorder %s72, %s73
      %p82 = scmp.eq.s32.totalorder %s20, 0
      %p83 = por %p81, %p82
      %p84 = scmp.ne.s32.totalorder %s72, %s73
      %p85 = scmp.eq.s32.totalorder %s21, 1
      %p86 = por %p84, %p85
      %p88 = scmp.ne.s32.totalorder %s73, %s87
      %p89 = scmp.eq.s32.totalorder %s21, 0
      %p90 = por %p88, %p89
      %s91 = ssub.s32 %s15, %s22
      %p92 = scmp.eq.s32.totalorder %s91, 0
      %s94 = sadd.s32 %s93, 1
      %s95 = scalar_select %p92, %s93, %s94
      %p98 = pneg %p92
      %p99 = scmp.eq.s32.totalorder %s15, 1
      %p100 = por %p98, %p99
      %p101 = scmp.ne.s32.totalorder %s93, %s96
      %p102 = scmp.eq.s32.totalorder %s15, 0
      %p103 = por %p101, %p102
      %p104 = scmp.ne.s32.totalorder %s93, %s96
      %p105 = scmp.eq.s32.totalorder %s20, 1
      %p106 = por %p104, %p105
      %p107 = scmp.ne.s32.totalorder %s96, %s97
      %p108 = scmp.eq.s32.totalorder %s20, 0
      %p109 = por %p107, %p108
      %p110 = scmp.ne.s32.totalorder %s96, %s97
      %p111 = scmp.eq.s32.totalorder %s21, 1
      %p112 = por %p110, %p111
      %p114 = scmp.ne.s32.totalorder %s97, %s113
      %p115 = scmp.eq.s32.totalorder %s21, 0
      %p116 = por %p114, %p115
      %p117 = scmp.le.s32.totalorder 1, %s15
      %p118 = scmp.lt.s32.totalorder %s15, 3
      %p119 = pnand %p117, %p118
      %p120 = pneg %p119
      // Predicated region
      $region9: #{tpu_custom_call.1} parent=5 // pred_check
        _
      $region10: #{tpu_custom_call.1} parent=5 // pred_check_branch
        %122 = sbr.rel (%p119) target = $region12
      $region11: #{tpu_custom_call.1} parent=5 // pred_region
        %s123 = ssub.s32 %s15, 1
        // Predicated region
        $region13: #{tpu_custom_call.1} parent=11 // pred_check
          %p124 = pneg %p62
        $region14: #{tpu_custom_call.1} parent=11 // pred_check_branch
          %126 = sbr.rel (%p124) target = $region16
        $region15: #{tpu_custom_call.1} parent=11 // pred_region
          _
        $region16: #{tpu_custom_call.1} parent=11 // pred_fallthru
          _
        // Predicated region
        $region17: #{tpu_custom_call.1} parent=11 // pred_check
          %p127 = pneg %p83
        $region18: #{tpu_custom_call.1} parent=11 // pred_check_branch
          %129 = sbr.rel (%p127) target = $region20
        $region19: #{tpu_custom_call.1} parent=11 // pred_region
          _
        $region20: #{tpu_custom_call.1} parent=11 // pred_fallthru
          _
      $region12: #{tpu_custom_call.1} parent=5 // pred_fallthru
        _
      %p130 = scmp.lt.s32.totalorder %s15, 2
      // Predicated region
      $region21: #{tpu_custom_call.1} parent=5 // pred_check
        %p131 = pneg %p130
      $region22: #{tpu_custom_call.1} parent=5 // pred_check_branch
        %133 = sbr.rel (%p131) target = $region24
      $region23: #{tpu_custom_call.1} parent=5 // pred_region
        // Predicated region
        $region25: #{tpu_custom_call.1} parent=23 // pred_check
          %p134 = pneg %p35
        $region26: #{tpu_custom_call.1} parent=23 // pred_check_branch
          %136 = sbr.rel (%p134) target = $region28
        $region27: #{tpu_custom_call.1} parent=23 // pred_region
          %s137 = sand.u32 %s25, 1
          %s138 = scalar_lea.sflag [#allocation3], %s137
          %s139 = sand.u32 %s25, 1
          %s140 = smul.addr %s139, 64
          %s141 = scalar_lea.vmem [#allocation2], %s140
          %s142 = smul.u32 2, %s15
          %s144 = ssub.s32 1024, 1024
          %145 = vsyncadd %s138, %s144
          %s146 = smul.addr %s142, 4
          %s147 = smul.addr %s146, 128
          %s148 = scalar_lea.hbm %s0, %s147
          %s149 = sshll.u32 %s141, 4
          %s150 = int_to_ptr.vmem [resolvable:$true] %s149
          %155 = dma.hbm_to_vmem [thread:$0]  %s148, 1024, %s150, %s138, 128, 128, 8
        $region28: #{tpu_custom_call.1} parent=23 // pred_fallthru
          _
      $region24: #{tpu_custom_call.1} parent=5 // pred_fallthru
        _
      %p156 = scmp.le.s32.totalorder 1, %s15
      %p157 = scmp.lt.s32.totalorder %s15, 3
      %p158 = pnand %p156, %p157
      %p159 = pneg %p158
      // Predicated region
      $region29: #{tpu_custom_call.1} parent=5 // pred_check
        _
      $region30: #{tpu_custom_call.1} parent=5 // pred_check_branch
        %161 = sbr.rel (%p158) target = $region32
      $region31: #{tpu_custom_call.1} parent=5 // pred_region
        %s162 = ssub.s32 %s15, 1
        %s163 = sand.u32 %s28, 1
        %s164 = scalar_lea.sflag [#allocation3], %s163
        %s165 = sand.u32 %s28, 1
        %s166 = smul.addr %s165, 64
        %s167 = scalar_lea.vmem [#allocation2], %s166
        // Predicated region
        $region33: #{tpu_custom_call.1} parent=31 // pred_check
          %p168 = pneg %p41
        $region34: #{tpu_custom_call.1} parent=31 // pred_check_branch
          %170 = sbr.rel (%p168) target = $region36
        $region35: #{tpu_custom_call.1} parent=31 // pred_region
          %171 = dma.done %s164, 1024
        $region36: #{tpu_custom_call.1} parent=31 // pred_fallthru
          _
        %s172 = sand.u32 %s28, 1
        %s173 = scalar_lea.sflag [#allocation3], %s172
        %s174 = sand.u32 %s28, 1
        %s175 = smul.addr %s174, 64
        %s176 = scalar_lea.vmem [#allocation2], %s175
        %p177 = pneg %p41
        %p178 = pneg %p38
        %p179 = pneg %p62
        %p180 = pneg %p59
        %p181 = pneg %p83
        %p182 = pneg %p80
        %p183 = pneg %p109
        %p184 = pneg %p106
        %s185 = sand.u32 %s96, 1
        %s186 = scalar_lea.sflag [#allocation4], %s185
        %s187 = sand.u32 %s96, 1
        %s188 = smul.addr %s187, 64
        %s189 = scalar_lea.vmem [#allocation5], %s188
        %s190 = smul.u32 2, %s20
        %s191 = smul.u32 2, %s20
        %v192 = vld [vmem:[%s167] sm:$0xff]
        %v193 = vld [vmem:[%s167 + $0x8] sm:$0xff]
        %v194 = vld [vmem:[%s167 + $0x10] sm:$0xff]
        %v195 = vld [vmem:[%s167 + $0x18] sm:$0xff]
        %v196 = vld [vmem:[%s167 + $0x20] sm:$0xff]
        %v197 = vld [vmem:[%s167 + $0x28] sm:$0xff]
        %v198 = vld [vmem:[%s167 + $0x30] sm:$0xff]
        %v199 = vld [vmem:[%s167 + $0x38] sm:$0xff]
        %200 = vadd.xlane.f32.xlu0 %v192
        %v201 = vpop.xlane.xlu0 %200
        %202 = vadd.xlane.f32.xlu0 %v193
        %v203 = vpop.xlane.xlu0 %202
        %204 = vadd.xlane.f32.xlu0 %v194
        %v205 = vpop.xlane.xlu0 %204
        %206 = vadd.xlane.f32.xlu0 %v195
        %v207 = vpop.xlane.xlu0 %206
        %208 = vadd.xlane.f32.xlu0 %v196
        %v209 = vpop.xlane.xlu0 %208
        %210 = vadd.xlane.f32.xlu0 %v197
        %v211 = vpop.xlane.xlu0 %210
        %212 = vadd.xlane.f32.xlu0 %v198
        %v213 = vpop.xlane.xlu0 %212
        %214 = vadd.xlane.f32.xlu0 %v199
        %v215 = vpop.xlane.xlu0 %214
        %v216 = vrcp.pop 128.0
        %v217 = vmul.f32 %v201, %v216
        %v218 = vmul.f32 %v203, %v216
        %v219 = vmul.f32 %v205, %v216
        %v220 = vmul.f32 %v207, %v216
        %v221 = vmul.f32 %v209, %v216
        %v222 = vmul.f32 %v211, %v216
        %v223 = vmul.f32 %v213, %v216
        %v224 = vmul.f32 %v215, %v216
        %225 = vmax.xlane.f32.xlu0 %v192
        %v226 = vpop.xlane.xlu0 %225
        %227 = vmax.xlane.f32.xlu0 %v193
        %v228 = vpop.xlane.xlu0 %227
        %229 = vmax.xlane.f32.xlu0 %v194
        %v230 = vpop.xlane.xlu0 %229
        %231 = vmax.xlane.f32.xlu0 %v195
        %v232 = vpop.xlane.xlu0 %231
        %233 = vmax.xlane.f32.xlu0 %v196
        %v234 = vpop.xlane.xlu0 %233
        %235 = vmax.xlane.f32.xlu0 %v197
        %v236 = vpop.xlane.xlu0 %235
        %237 = vmax.xlane.f32.xlu0 %v198
        %v238 = vpop.xlane.xlu0 %237
        %239 = vmax.xlane.f32.xlu0 %v199
        %v240 = vpop.xlane.xlu0 %239
        %v249 = vlaneseq
        %v250 = vand.u32 %v249, 127
        %v251 = vlaneseq
        %v252 = vshrl.u32 %v251, 7
        %v253 = vsub.s32 %v250, %v252
        %v254 = vrot.slane %v217, %v253
        %v255 = vadd.s32 %v250, 4294967288
        %v256 = vlaneseq
        %v257 = vshrl.u32 %v256, 7
        %v258 = vsub.s32 %v255, %v257
        %v259 = vrot.slane %v218, %v258
        %vm260 = vcmask 130112
        %v261 = vsel %vm260, %v259, %v254
        %v262 = vadd.s32 %v250, 4294967280
        %v263 = vlaneseq
        %v264 = vshrl.u32 %v263, 7
        %v265 = vsub.s32 %v262, %v264
        %v266 = vrot.slane %v219, %v265
        %vm267 = vcmask 195712
        %v268 = vsel %vm267, %v266, %v261
        %v269 = vadd.s32 %v250, 4294967272
        %v270 = vlaneseq
        %v271 = vshrl.u32 %v270, 7
        %v272 = vsub.s32 %v269, %v271
        %v273 = vrot.slane %v220, %v272
        %vm274 = vcmask 261312
        %v275 = vsel %vm274, %v273, %v268
        %v276 = vlaneseq
        %v277 = vshrl.u32 %v276, 7
        %v278 = vsub.s32 %v250, %v277
        %v279 = vrot.slane %v221, %v278
        %v280 = vlaneseq
        %v281 = vshrl.u32 %v280, 7
        %v282 = vsub.s32 %v255, %v281
        %v283 = vrot.slane %v222, %v282
        %v284 = vsel %vm260, %v283, %v279
        %v285 = vlaneseq
        %v286 = vshrl.u32 %v285, 7
        %v287 = vsub.s32 %v262, %v286
        %v288 = vrot.slane %v223, %v287
        %v289 = vsel %vm267, %v288, %v284
        %v290 = vlaneseq
        %v291 = vshrl.u32 %v290, 7
        %v292 = vsub.s32 %v269, %v291
        %v293 = vrot.slane %v224, %v292
        %v294 = vsel %vm274, %v293, %v289
        %vm295 = vcmask 1041409
        %v296 = vsel %vm295, %v294, %v275
        %v306 = vlaneseq
        %v307 = vshrl.u32 %v306, 7
        %v308 = vsub.s32 %v250, %v307
        %v309 = vrot.slane %v226, %v308
        %v310 = vlaneseq
        %v311 = vshrl.u32 %v310, 7
        %v312 = vsub.s32 %v255, %v311
        %v313 = vrot.slane %v228, %v312
        %v314 = vsel %vm260, %v313, %v309
        %v315 = vlaneseq
        %v316 = vshrl.u32 %v315, 7
        %v317 = vsub.s32 %v262, %v316
        %v318 = vrot.slane %v230, %v317
        %v319 = vsel %vm267, %v318, %v314
        %v320 = vlaneseq
        %v321 = vshrl.u32 %v320, 7
        %v322 = vsub.s32 %v269, %v321
        %v323 = vrot.slane %v232, %v322
        %v324 = vsel %vm274, %v323, %v319
        %v325 = vlaneseq
        %v326 = vshrl.u32 %v325, 7
        %v327 = vsub.s32 %v250, %v326
        %v328 = vrot.slane %v234, %v327
        %v329 = vlaneseq
        %v330 = vshrl.u32 %v329, 7
        %v331 = vsub.s32 %v255, %v330
        %v332 = vrot.slane %v236, %v331
        %v333 = vsel %vm260, %v332, %v328
        %v334 = vlaneseq
        %v335 = vshrl.u32 %v334, 7
        %v336 = vsub.s32 %v262, %v335
        %v337 = vrot.slane %v238, %v336
        %v338 = vsel %vm267, %v337, %v333
        %v339 = vlaneseq
        %v340 = vshrl.u32 %v339, 7
        %v341 = vsub.s32 %v269, %v340
        %v342 = vrot.slane %v240, %v341
        %v343 = vsel %vm274, %v342, %v338
        %vm344 = vcmask 1043459
        %v345 = vsel %vm344, %v343, %v324
        %vm347 = vcmask 1041408
        %v348 = vsel %vm347, %v296, %v345
        %v349 = vld [vmem:[%s1] sm:$0x3]
        %v350 = vld [vmem:[%s2] sm:$0xff]
        %v351 = vld [vmem:[%s2 + $0x8] sm:$0xff]
        %v352 = vld [vmem:[%s2 + $0x10] sm:$0xff]
        %v353 = vld [vmem:[%s2 + $0x18] sm:$0xff]
        %vm354 = vcmask 261120
        %v356 = vsel %vm354, %v348, 0
        %v359 = vsel %vm354, %v349, 0
        %361 = vmatprep.subr.mxu0 0.0
        %362 = vmatpush1.xpose.msra.mxu0 0.0
        %363 = vmatprep.subr.mxu0 0.0
        %364 = vmatpush1.xpose.msra.mxu0 0.0
        %365 = vmatprep.subr.mxu0 0.0
        %366 = vmatpush1.xpose.msra.mxu0 0.0
        %367 = vmatprep.subr.mxu0 0.0
        %368 = vmatpush1.xpose.msra.mxu0 0.0
        %369 = vmatprep.subr.mxu0 0.0
        %370 = vmatpush1.xpose.msra.mxu0 0.0
        %371 = vmatprep.subr.mxu0 0.0
        %372 = vmatpush1.xpose.msra.mxu0 0.0
        %373 = vmatprep.subr.mxu0 0.0
        %374 = vmatpush1.xpose.msra.mxu0 0.0
        %375 = vmatprep.subr.mxu0 0.0
        %376 = vmatpush1.xpose.msra.mxu0 0.0
        %377 = vmatprep.subr.mxu0 0.0
        %378 = vmatpush1.xpose.msra.mxu0 0.0
        %379 = vmatprep.subr.mxu0 0.0
        %380 = vmatpush1.xpose.msra.mxu0 0.0
        %381 = vmatprep.subr.mxu0 0.0
        %382 = vmatpush1.xpose.msra.mxu0 0.0
        %383 = vmatprep.subr.mxu0 0.0
        %384 = vmatpush1.xpose.msra.mxu0 0.0
        %385 = vmatprep.subr.mxu0 0.0
        %386 = vmatpush1.xpose.msra.mxu0 0.0
        %387 = vmatprep.subr.mxu0 0.0
        %388 = vmatpush1.xpose.msra.mxu0 0.0
        %389 = vmatprep.subr.mxu0 0.0
        %390 = vmatpush1.xpose.msra.mxu0 0.0
        %391 = vmatprep.subr.mxu0 0.0
        %392 = vmatpush1.xpose.msra.mxu0 %v359
        %393 = vmatprep.subr.mxu0 0.0
        %394 = vmatpush2.xpose.msra.mxu0 0.0
        %395 = vmatprep.subr.mxu0 0.0
        %396 = vmatpush2.xpose.msra.mxu0 0.0
        %397 = vmatprep.subr.mxu0 0.0
        %398 = vmatpush2.xpose.msra.mxu0 0.0
        %399 = vmatprep.subr.mxu0 0.0
        %400 = vmatpush2.xpose.msra.mxu0 0.0
        %401 = vmatprep.subr.mxu0 0.0
        %402 = vmatpush2.xpose.msra.mxu0 0.0
        %403 = vmatprep.subr.mxu0 0.0
        %404 = vmatpush2.xpose.msra.mxu0 0.0
        %405 = vmatprep.subr.mxu0 0.0
        %406 = vmatpush2.xpose.msra.mxu0 0.0
        %407 = vmatprep.subr.mxu0 0.0
        %408 = vmatpush2.xpose.msra.mxu0 0.0
        %409 = vmatprep.subr.mxu0 0.0
        %410 = vmatpush2.xpose.msra.mxu0 0.0
        %411 = vmatprep.subr.mxu0 0.0
        %412 = vmatpush2.xpose.msra.mxu0 0.0
        %413 = vmatprep.subr.mxu0 0.0
        %414 = vmatpush2.xpose.msra.mxu0 0.0
        %415 = vmatprep.subr.mxu0 0.0
        %416 = vmatpush2.xpose.msra.mxu0 0.0
        %417 = vmatprep.subr.mxu0 0.0
        %418 = vmatpush2.xpose.msra.mxu0 0.0
        %419 = vmatprep.subr.mxu0 0.0
        %420 = vmatpush2.xpose.msra.mxu0 0.0
        %421 = vmatprep.subr.mxu0 0.0
        %422 = vmatpush2.xpose.msra.mxu0 0.0
        %423 = vmatprep.subr.mxu0 0.0
        %424 = vmatpush2.xpose.msra.mxu0 0.0
        %425 = vmatprep.mubr.f32.mxu0 0.0
        %426 = vmatmul.mubr.f32.gmra.mxu0 %v356
        %v427 = vpop.f32.mrf.mxu0
        %v428 = vadd.f32 0.0, %v427
        %v429 = vpop.f32.mrf.mxu0
        %430 = vdwg.mxu0
        %v431 = vmax.f32 %v428, 0.0
        %vm432 = vcmask 15360
        %v434 = vsel %vm432, %v431, 0
        %v437 = vsel %vm432, %v350, 0
        %v440 = vsel %vm432, %v351, 0
        %v443 = vsel %vm432, %v352, 0
        %v446 = vsel %vm432, %v353, 0
        %448 = vmatprep.subr.mxu0 0.0
        %449 = vmatpush1.xpose.msra.mxu0 0.0
        %450 = vmatprep.subr.mxu0 0.0
        %451 = vmatpush1.xpose.msra.mxu0 0.0
        %452 = vmatprep.subr.mxu0 0.0
        %453 = vmatpush1.xpose.msra.mxu0 0.0
        %454 = vmatprep.subr.mxu0 0.0
        %455 = vmatpush1.xpose.msra.mxu0 0.0
        %456 = vmatprep.subr.mxu0 0.0
        %457 = vmatpush1.xpose.msra.mxu0 0.0
        %458 = vmatprep.subr.mxu0 0.0
        %459 = vmatpush1.xpose.msra.mxu0 0.0
        %460 = vmatprep.subr.mxu0 0.0
        %461 = vmatpush1.xpose.msra.mxu0 0.0
        %462 = vmatprep.subr.mxu0 0.0
        %463 = vmatpush1.xpose.msra.mxu0 0.0
        %464 = vmatprep.subr.mxu0 0.0
        %465 = vmatpush1.xpose.msra.mxu0 0.0
        %466 = vmatprep.subr.mxu0 0.0
        %467 = vmatpush1.xpose.msra.mxu0 0.0
        %468 = vmatprep.subr.mxu0 0.0
        %469 = vmatpush1.xpose.msra.mxu0 0.0
        %470 = vmatprep.subr.mxu0 0.0
        %471 = vmatpush1.xpose.msra.mxu0 0.0
        %472 = vmatprep.subr.mxu0 0.0
        %473 = vmatpush1.xpose.msra.mxu0 %v446
        %474 = vmatprep.subr.mxu0 0.0
        %475 = vmatpush1.xpose.msra.mxu0 %v443
        %476 = vmatprep.subr.mxu0 0.0
        %477 = vmatpush1.xpose.msra.mxu0 %v440
        %478 = vmatprep.subr.mxu0 0.0
        %479 = vmatpush1.xpose.msra.mxu0 %v437
        %480 = vmatprep.subr.mxu0 0.0
        %481 = vmatpush2.xpose.msra.mxu0 0.0
        %482 = vmatprep.subr.mxu0 0.0
        %483 = vmatpush2.xpose.msra.mxu0 0.0
        %484 = vmatprep.subr.mxu0 0.0
        %485 = vmatpush2.xpose.msra.mxu0 0.0
        %486 = vmatprep.subr.mxu0 0.0
        %487 = vmatpush2.xpose.msra.mxu0 0.0
        %488 = vmatprep.subr.mxu0 0.0
        %489 = vmatpush2.xpose.msra.mxu0 0.0
        %490 = vmatprep.subr.mxu0 0.0
        %491 = vmatpush2.xpose.msra.mxu0 0.0
        %492 = vmatprep.subr.mxu0 0.0
        %493 = vmatpush2.xpose.msra.mxu0 0.0
        %494 = vmatprep.subr.mxu0 0.0
        %495 = vmatpush2.xpose.msra.mxu0 0.0
        %496 = vmatprep.subr.mxu0 0.0
        %497 = vmatpush2.xpose.msra.mxu0 0.0
        %498 = vmatprep.subr.mxu0 0.0
        %499 = vmatpush2.xpose.msra.mxu0 0.0
        %500 = vmatprep.subr.mxu0 0.0
        %501 = vmatpush2.xpose.msra.mxu0 0.0
        %502 = vmatprep.subr.mxu0 0.0
        %503 = vmatpush2.xpose.msra.mxu0 0.0
        %504 = vmatprep.subr.mxu0 0.0
        %505 = vmatpush2.xpose.msra.mxu0 0.0
        %506 = vmatprep.subr.mxu0 0.0
        %507 = vmatpush2.xpose.msra.mxu0 0.0
        %508 = vmatprep.subr.mxu0 0.0
        %509 = vmatpush2.xpose.msra.mxu0 0.0
        %510 = vmatprep.subr.mxu0 0.0
        %511 = vmatpush2.xpose.msra.mxu0 0.0
        %512 = vmatprep.mubr.f32.mxu0 0.0
        %513 = vmatmul.mubr.f32.gmra.mxu0 %v434
        %v514 = vpop.f32.mrf.mxu0
        %v515 = vadd.f32 0.0, %v514
        %v516 = vpop.f32.mrf.mxu0
        %517 = vdwg.mxu0
        %v519 = vrot.slane %v515, 2
        %v521 = vadd.f32 %v515, %v519
        %v522 = vxor.u32 %v521, 2147483648
        %v523 = vmul.f32 %v522, 1.442695
        %v524 = vpow.pop %v523
        %v525 = vadd.f32 %v524, 1.0
        %v526 = vrcp.pop %v525
        %v527 = vmul.f32 1.0, %v526
        %v528 = vlaneseq
        %v529 = vshrl.u32 %v528, 7
        %v530 = vsub.s32 0, %v529
        %v531 = vrot.slane %v527, %v530
        %533 = vbcast.lane.b32.xlu0 %v531, 256
        %v534 = vpop.permute.xlu0 %533
        %s536 = sor.u32 256, 8
        %537 = vbcast.lane.b32.xlu0 %v531, %s536
        %v538 = vpop.permute.xlu0 %537
        %s540 = sor.u32 256, 16
        %541 = vbcast.lane.b32.xlu0 %v531, %s540
        %v542 = vpop.permute.xlu0 %541
        %s544 = sor.u32 256, 24
        %545 = vbcast.lane.b32.xlu0 %v531, %s544
        %v546 = vpop.permute.xlu0 %545
        %v547 = vlaneseq
        %v548 = vshrl.u32 %v547, 7
        %v549 = vsub.s32 1, %v548
        %v550 = vrot.slane %v527, %v549
        %552 = vbcast.lane.b32.xlu0 %v550, 256
        %v553 = vpop.permute.xlu0 %552
        %s555 = sor.u32 256, 8
        %556 = vbcast.lane.b32.xlu0 %v550, %s555
        %v557 = vpop.permute.xlu0 %556
        %s559 = sor.u32 256, 16
        %560 = vbcast.lane.b32.xlu0 %v550, %s559
        %v561 = vpop.permute.xlu0 %560
        %s563 = sor.u32 256, 24
        %564 = vbcast.lane.b32.xlu0 %v550, %s563
        %v565 = vpop.permute.xlu0 %564
        %v566 = vmul.f32 %v192, %v534
        %v567 = vmul.f32 %v193, %v538
        %v568 = vmul.f32 %v194, %v542
        %v569 = vmul.f32 %v195, %v546
        %v570 = vmul.f32 %v196, %v553
        %v571 = vmul.f32 %v197, %v557
        %v572 = vmul.f32 %v198, %v561
        %v573 = vmul.f32 %v199, %v565
        %574 = vst [vmem:[%s189] sm:$0xff] %v566
        %575 = vst [vmem:[%s189 + $0x8] sm:$0xff] %v567
        %576 = vst [vmem:[%s189 + $0x10] sm:$0xff] %v568
        %577 = vst [vmem:[%s189 + $0x18] sm:$0xff] %v569
        %578 = vst [vmem:[%s189 + $0x20] sm:$0xff] %v570
        %579 = vst [vmem:[%s189 + $0x28] sm:$0xff] %v571
        %580 = vst [vmem:[%s189 + $0x30] sm:$0xff] %v572
        %581 = vst [vmem:[%s189 + $0x38] sm:$0xff] %v573
        %s582 = sand.u32 %s96, 1
        %s583 = scalar_lea.sflag [#allocation4], %s582
        %s584 = sand.u32 %s96, 1
        %s585 = smul.addr %s584, 64
        %s586 = scalar_lea.vmem [#allocation5], %s585
        // Predicated region
        $region37: #{tpu_custom_call.1} parent=31 // pred_check
          %p587 = pneg %p106
        $region38: #{tpu_custom_call.1} parent=31 // pred_check_branch
          %589 = sbr.rel (%p587) target = $region40
        $region39: #{tpu_custom_call.1} parent=31 // pred_region
          %s590 = smul.u32 2, %s20
          %s592 = ssub.s32 1024, 1024
          %593 = vsyncadd %s583, %s592
          %s594 = smul.addr %s590, 4
          %s595 = smul.addr %s594, 128
          %s596 = scalar_lea.hbm %s3, %s595
          %s597 = sshll.u32 %s586, 4
          %s598 = int_to_ptr.vmem [resolvable:$true] %s597
          %603 = dma.vmem_to_hbm [thread:$0]  %s598, 1024, %s596, %s583, 128, 128, 8
        $region40: #{tpu_custom_call.1} parent=31 // pred_fallthru
          _
      $region32: #{tpu_custom_call.1} parent=5 // pred_fallthru
        _
      %p604 = scmp.le.s32.totalorder 2, %s15
      // Predicated region
      $region41: #{tpu_custom_call.1} parent=5 // pred_check
        %p605 = pneg %p604
      $region42: #{tpu_custom_call.1} parent=5 // pred_check_branch
        %607 = sbr.rel (%p605) target = $region44
      $region43: #{tpu_custom_call.1} parent=5 // pred_region
        %s608 = ssub.s32 %s15, 2
        // Predicated region
        $region45: #{tpu_custom_call.1} parent=43 // pred_check
          %p609 = pneg %p112
        $region46: #{tpu_custom_call.1} parent=43 // pred_check_branch
          %611 = sbr.rel (%p609) target = $region48
        $region47: #{tpu_custom_call.1} parent=43 // pred_region
          %s612 = sand.u32 %s97, 1
          %s613 = scalar_lea.sflag [#allocation4], %s612
          %s614 = sand.u32 %s97, 1
          %s615 = smul.addr %s614, 64
          %s616 = scalar_lea.vmem [#allocation5], %s615
          %617 = dma.done %s613, 1024
        $region48: #{tpu_custom_call.1} parent=43 // pred_fallthru
          _
      $region44: #{tpu_custom_call.1} parent=5 // pred_fallthru
        _
    $region6: #{tpu_custom_call.1} parent=1 // loop_footer
      %s19 = sadd.s32 1, %s15
    $region7: #{tpu_custom_call.1} parent=1 // loop_footer_branch
      %14 = sbr.rel target = $region3
    $region8: #{tpu_custom_call.1} parent=1 // loop_exit
      _
    %618 = vsyncpa [#allocation3], 1
    %s619 = scalar_lea.sflag [#allocation3], 1
    %620 = vsyncpa %s619, 1
    %621 = vsyncpa [#allocation4], 1
    %s622 = scalar_lea.sflag [#allocation4], 1
    %623 = vsyncpa %s622, 1

</llo_original>
